<compile_context>
chip_gen: v6e
topology: v6e:2x2x1
jax: 0.10.0
libtpu: 0.0.40
codegen_flags: <defaults>
</compile_context>

<pallas_src>
import functools

import jax
import jax.numpy as jnp
from jax import lax
from jax.experimental import pallas as pl
from jax.experimental.pallas import tpu as pltpu


def _round_up(n, m):
    return ((n + m - 1) // m) * m


# Flip to True only if a profile shows the VALU binding: routes GELU through
# the EUP (tanh approx) instead of the exact-erf polynomial on the VALU.
_APPROX_GELU = False


def _gelu(h):
    if _APPROX_GELU:
        c = jnp.float32(0.7978845608028654)  # sqrt(2/pi)
        return 0.5 * h * (1.0 + jnp.tanh(c * (h + 0.044715 * h * h * h)))
    return 0.5 * h * (1.0 + lax.erf(h * jnp.float32(0.7071067811865476)))


def _enhanced_projection_kernel(x_ref, w1_ref, b1_ref, w2_ref, b2_ref,
                                gamma_ref, beta_ref, o_ref, acc_ref,
                                *, proj_dim, proj_p):
    j = pl.program_id(1)

    @pl.when(j == 0)
    def _():
        acc_ref[...] = jnp.zeros_like(acc_ref)

    # --- Linear 1 (this hid tile) + GELU; MXU in native dtype, f32 accum ---
    h = jnp.dot(x_ref[...], w1_ref[...], preferred_element_type=jnp.float32)
    h = _gelu(h + b1_ref[...])

    # --- Dropout: eval-mode identity ---
    # TODO(synk): training-mode dropout (PRNG mask) not emitted; eval semantics only.

    # --- Linear 2 partial sum over this hid tile ---
    acc_ref[...] += jnp.dot(h.astype(w2_ref.dtype), w2_ref[...],
                            preferred_element_type=jnp.float32)

    # --- Finalize on the last hid tile: bias2 + LayerNorm(eps=1e-5) + affine ---
    @pl.when(j == pl.num_programs(1) - 1)
    def _():
        y = acc_ref[...] + b2_ref[...]          # padded lanes of y are exactly 0
        inv_n = jnp.float32(1.0 / proj_dim)
        mean = jnp.sum(y, axis=-1, keepdims=True) * inv_n
        # Padded lanes contribute 0 to sum(y*y) -> E[y^2]-mean^2 is exact over
        # the true projection width; no iota/where mask needed.
        var = jnp.sum(y * y, axis=-1, keepdims=True) * inv_n - mean * mean
        var = jnp.maximum(var, 0.0)
        yn = (y - mean) * lax.rsqrt(var + jnp.float32(1e-5))
        out = yn * gamma_ref[...] + beta_ref[...]
        if proj_p != proj_dim:                  # static: drop padded lanes
            out = out[:, :proj_dim]
        o_ref[...] = out.astype(o_ref.dtype)


def _vmem_capacity_bytes():
    try:
        cap = int(getattr(pltpu.get_tpu_info(), "vmem_capacity_bytes", 0))
        if cap > 0:
            return cap
    except Exception:
        pass
    return 64 * 1024 * 1024   # conservative (v7x-sized) fallback


def _choose_tiles(M, input_dim, hid_p, proj_p, proj_dim, itemsize, wsize, budget):
    # Row tile: big & MXU-friendly, but keep >=2 row tiles (floor 128) so the
    # "parallel" row axis can shard across v7x's two TensorCores.
    tm_max = min(512, _round_up(M, 8), max(128, _round_up(-(-M // 2), 8)))
    tm_cands = [tm_max] + [c for c in (256, 128, 64, 32, 16, 8) if c < tm_max]

    # Hidden tile must divide hid_p exactly: it is a contraction dim for the
    # second matmul, so a ragged hid tile would pull garbage into the acc.
    n128 = hid_p // 128
    tk_cands = sorted({d * 128 for d in range(1, n128 + 1) if n128 % d == 0},
                      reverse=True)

    def footprint(tm, tk):
        dbuf = 2 * (tm * input_dim * itemsize       # x tile (double-buffered)
                    + input_dim * tk * wsize        # W1 hid tile
                    + tk * 4                        # b1 tile (f32)
                    + tk * proj_p * wsize           # W2 hid tile
                    + 3 * proj_p * 4                # b2 / gamma / beta
                    + tm * proj_dim * itemsize)     # out tile
        scratch = tm * proj_p * 4                   # f32 accumulator
        interm = (2 * tm * tk + 3 * tm * proj_p) * 4  # h/GELU + LN temporaries
        return dbuf + scratch + interm

    # Prefer resident/large weight tiles with tm >= 128; only shrink tm below
    # 128 (MXU-starving) as a last resort.
    for min_tm in (min(128, tm_max), 8):
        for tk in tk_cands:
            for tm in tm_cands:
                if tm < min_tm:
                    continue
                if footprint(tm, tk) <= budget:
                    return tm, tk
    return 8, 128


@jax.jit
def enhanced_projection(x, w1, b1, w2, b2, gamma, beta):
    """x: [..., input_dim] -> [..., projection_dim]  (eval-mode forward)."""
    orig_shape = x.shape
    input_dim = orig_shape[-1]
    hidden_dim = w1.shape[1]
    proj_dim = w2.shape[1]

    x2d = x.reshape(-1, input_dim)          # metadata only; activations never padded
    M = x2d.shape[0]
    itemsize = jnp.dtype(x.dtype).itemsize
    wsize = jnp.dtype(w1.dtype).itemsize

    # Lane-dense padded widths for parameters only (cheap, exact).
    hid_p = _round_up(hidden_dim, 128)
    proj_p = _round_up(proj_dim, 128)

    cap = _vmem_capacity_bytes()            # generation-aware VMEM sizing
    budget = int(0.70 * cap)
    tm, tk = _choose_tiles(M, input_dim, hid_p, proj_p, proj_dim,
                           itemsize, wsize, budget)
    nm = -(-M // tm)                        # ragged last row tile is fine (row-local math)
    nj = hid_p // tk                        # exact division by construction

    w1_p = jnp.pad(w1, ((0, 0), (0, hid_p - hidden_dim)))
    w2_p = jnp.pad(w2, ((0, hid_p - hidden_dim), (0, proj_p - proj_dim)))
    b1_p = jnp.pad(b1.astype(jnp.float32), (0, hid_p - hidden_dim)).reshape(1, hid_p)
    b2_p = jnp.pad(b2.astype(jnp.float32), (0, proj_p - proj_dim)).reshape(1, proj_p)
    g_p = jnp.pad(gamma.astype(jnp.float32), (0, proj_p - proj_dim)).reshape(1, proj_p)
    bt_p = jnp.pad(beta.astype(jnp.float32), (0, proj_p - proj_dim)).reshape(1, proj_p)

    cost = pl.CostEstimate(
        flops=2 * M * (input_dim * hid_p + hid_p * proj_p),
        transcendentals=M * hid_p,          # erf in GELU
        bytes_accessed=(M * input_dim * itemsize          # x read
                        + M * proj_dim * itemsize         # out write
                        + nm * (input_dim * hid_p + hid_p * proj_p) * wsize
                        + (hid_p + 3 * proj_p) * 4),
    )

    out = pl.pallas_call(
        functools.partial(_enhanced_projection_kernel,
                          proj_dim=proj_dim, proj_p=proj_p),
        out_shape=jax.ShapeDtypeStruct((M, proj_dim), x.dtype),
        grid_spec=pltpu.PrefetchScalarGridSpec(
            num_scalar_prefetch=0,
            grid=(nm, nj),
            in_specs=[
                pl.BlockSpec((tm, input_dim), lambda m, j: (m, 0)),   # x row tile
                pl.BlockSpec((input_dim, tk), lambda m, j: (0, j)),   # W1 hid tile
                pl.BlockSpec((1, tk), lambda m, j: (0, j)),           # b1
                pl.BlockSpec((tk, proj_p), lambda m, j: (j, 0)),      # W2 hid tile
                pl.BlockSpec((1, proj_p), lambda m, j: (0, 0)),       # b2
                pl.BlockSpec((1, proj_p), lambda m, j: (0, 0)),       # gamma
                pl.BlockSpec((1, proj_p), lambda m, j: (0, 0)),       # beta
            ],
            out_specs=pl.BlockSpec((tm, proj_dim), lambda m, j: (m, 0)),
            scratch_shapes=[pltpu.VMEM((tm, proj_p), jnp.float32)],
        ),
        compiler_params=pltpu.CompilerParams(
            dimension_semantics=("parallel", "arbitrary"),
            vmem_limit_bytes=int(max(32 * 1024 * 1024,
                                     min(int(0.85 * cap), cap - (4 << 20)))),
        ),
        cost_estimate=cost,
    )(x2d, w1_p, b1_p, w2_p, b2_p, g_p, bt_p)

    return out.reshape(*orig_shape[:-1], proj_dim)


def _reference(x, w1, b1, w2, b2, gamma, beta):
    hp = lax.Precision.HIGHEST
    h = jnp.dot(x.astype(jnp.float32), w1, precision=hp) + b1
    h = 0.5 * h * (1.0 + lax.erf(h / jnp.sqrt(2.0)))        # exact GELU
    y = jnp.dot(h, w2, precision=hp) + b2
    mean = jnp.mean(y, axis=-1, keepdims=True)
    var = jnp.mean((y - mean) ** 2, axis=-1, keepdims=True)
    return (y - mean) / jnp.sqrt(var + 1e-5) * gamma + beta


if __name__ == "__main__":
    # Small deterministic setup: EnhancedProjection(input_dim=32, projection_dim=16)
    batch, seq = 2, 8
    input_dim, projection_dim = 32, 16
    hidden_dim = projection_dim * 2          # default hidden_dim

    key = jax.random.PRNGKey(0)
    kx, kw1, kb1, kw2, kb2 = jax.random.split(key, 5)

    x = jax.random.normal(kx, (batch, seq, input_dim), dtype=jnp.float32)

    w1 = jax.random.uniform(kw1, (input_dim, hidden_dim), jnp.float32,
                            -1.0 / jnp.sqrt(input_dim), 1.0 / jnp.sqrt(input_dim))
    b1 = jax.random.uniform(kb1, (hidden_dim,), jnp.float32,
                            -1.0 / jnp.sqrt(input_dim), 1.0 / jnp.sqrt(input_dim))
    w2 = jax.random.uniform(kw2, (hidden_dim, projection_dim), jnp.float32,
                            -1.0 / jnp.sqrt(hidden_dim), 1.0 / jnp.sqrt(hidden_dim))
    b2 = jax.random.uniform(kb2, (projection_dim,), jnp.float32,
                            -1.0 / jnp.sqrt(hidden_dim), 1.0 / jnp.sqrt(hidden_dim))
    gamma = jnp.ones((projection_dim,), jnp.float32)   # LayerNorm weight init
    beta = jnp.zeros((projection_dim,), jnp.float32)   # LayerNorm bias init

    out = enhanced_projection(x, w1, b1, w2, b2, gamma, beta)
    out = jax.block_until_ready(out)

    ref = _reference(x, w1, b1, w2, b2, gamma, beta)
    assert out.shape == (batch, seq, projection_dim)
    assert bool(jnp.allclose(out, ref, atol=2e-3, rtol=2e-3)), "mismatch vs reference"

    print("KERNEL_OK")
</pallas_src>

<mosaic_0001>
module attributes {stable_mosaic.version = 11 : i64} {
  func.func @_enhanced_projection_kernel(%arg0: i32, %arg1: i32, %arg2: memref<16x32xf32, #tpu.memory_space<vmem>>, %arg3: memref<32x128xf32, #tpu.memory_space<vmem>>, %arg4: memref<1x128xf32, #tpu.memory_space<vmem>>, %arg5: memref<128x128xf32, #tpu.memory_space<vmem>>, %arg6: memref<1x128xf32, #tpu.memory_space<vmem>>, %arg7: memref<1x128xf32, #tpu.memory_space<vmem>>, %arg8: memref<1x128xf32, #tpu.memory_space<vmem>>, %arg9: memref<16x16xf32, #tpu.memory_space<vmem>>, %arg10: memref<16x128xf32, #tpu.memory_space<vmem>>) attributes {dimension_semantics = [#tpu.dimension_semantics<parallel>, #tpu.dimension_semantics<arbitrary>], iteration_bounds = array<i64: 1, 1>, scalar_prefetch = 0 : i64, scratch_operands = 1 : i64, tpu.core_type = #tpu.core_type<tc>, window_params = [{transform_indices = @transform_0, window_bounds = array<i64: 16, 32>}, {transform_indices = @transform_1, window_bounds = array<i64: 32, 128>}, {transform_indices = @transform_2, window_bounds = array<i64: 1, 128>}, {transform_indices = @transform_3, window_bounds = array<i64: 128, 128>}, {pipeline_mode = #tpu.pipeline_mode<synchronous>, transform_indices = @transform_4, window_bounds = array<i64: 1, 128>}, {pipeline_mode = #tpu.pipeline_mode<synchronous>, transform_indices = @transform_5, window_bounds = array<i64: 1, 128>}, {pipeline_mode = #tpu.pipeline_mode<synchronous>, transform_indices = @transform_6, window_bounds = array<i64: 1, 128>}, {transform_indices = @transform_7, window_bounds = array<i64: 16, 16>}]} {
    %c0_i32 = arith.constant 0 : i32
    %0 = arith.cmpi eq, %arg1, %c0_i32 : i32
    %1 = arith.extui %0 : i1 to i32
    %c0_i32_0 = arith.constant 0 : i32
    %2 = arith.cmpi ne, %1, %c0_i32_0 : i32
    scf.if %2 {
      %cst_18 = arith.constant 0.000000e+00 : f32
      %25 = vector.broadcast %cst_18 : f32 to vector<16x128xf32>
      %c0_19 = arith.constant 0 : index
      %c0_20 = arith.constant 0 : index
      %26 = vector.load %arg10[%c0_19, %c0_20] : memref<16x128xf32, #tpu.memory_space<vmem>>, vector<16x128xf32>
      tpu.vector_store %arg10[%c0_19, %c0_20], %25 {strides = array<i32>} : memref<16x128xf32, #tpu.memory_space<vmem>>, vector<16x128xf32>,
    } else {
    }
    %c0 = arith.constant 0 : index
    %c0_1 = arith.constant 0 : index
    %3 = vector.load %arg2[%c0, %c0_1] : memref<16x32xf32, #tpu.memory_space<vmem>>, vector<16x32xf32>
    %c0_2 = arith.constant 0 : index
    %c0_3 = arith.constant 0 : index
    %4 = vector.load %arg3[%c0_2, %c0_3] : memref<32x128xf32, #tpu.memory_space<vmem>>, vector<32x128xf32>
    %cst = arith.constant dense<0.000000e+00> : vector<16x128xf32>
    %5 = tpu.matmul %3, %4, %cst {dimension_numbers = #tpu.dot_dimension_numbers<[1], [0], [0], [1], [0, 0, 1, 1], [], []>} : vector<16x32xf32>, vector<32x128xf32>, vector<16x128xf32> -> vector<16x128xf32>
    %c0_4 = arith.constant 0 : index
    %c0_5 = arith.constant 0 : index
    %6 = vector.load %arg4[%c0_4, %c0_5] : memref<1x128xf32, #tpu.memory_space<vmem>>, vector<1x128xf32>
    %7 = vector.broadcast %6 : vector<1x128xf32> to vector<16x128xf32>
    %8 = arith.addf %5, %7 : vector<16x128xf32>
    %cst_6 = arith.constant 5.000000e-01 : f32
    %9 = vector.broadcast %cst_6 : f32 to vector<16x128xf32>
    %10 = arith.mulf %9, %8 : vector<16x128xf32>
    %cst_7 = arith.constant 0.707106769 : f32
    %11 = vector.broadcast %cst_7 : f32 to vector<16x128xf32>
    %12 = arith.mulf %8, %11 : vector<16x128xf32>
    %13 = math.erf %12 : vector<16x128xf32>
    %cst_8 = arith.constant 1.000000e+00 : f32
    %14 = vector.broadcast %cst_8 : f32 to vector<16x128xf32>
    %15 = arith.addf %14, %13 : vector<16x128xf32>
    %16 = arith.mulf %10, %15 : vector<16x128xf32>
    %c0_9 = arith.constant 0 : index
    %c0_10 = arith.constant 0 : index
    %17 = vector.load %arg10[%c0_9, %c0_10] : memref<16x128xf32, #tpu.memory_space<vmem>>, vector<16x128xf32>
    %c0_11 = arith.constant 0 : index
    %c0_12 = arith.constant 0 : index
    %18 = vector.load %arg5[%c0_11, %c0_12] : memref<128x128xf32, #tpu.memory_space<vmem>>, vector<128x128xf32>
    %cst_13 = arith.constant dense<0.000000e+00> : vector<16x128xf32>
    %19 = tpu.matmul %16, %18, %cst_13 {dimension_numbers = #tpu.dot_dimension_numbers<[1], [0], [0], [1], [0, 0, 1, 1], [], []>} : vector<16x128xf32>, vector<128x128xf32>, vector<16x128xf32> -> vector<16x128xf32>
    %20 = arith.addf %17, %19 : vector<16x128xf32>
    %c0_14 = arith.constant 0 : index
    %c0_15 = arith.constant 0 : index
    %21 = vector.load %arg10[%c0_14, %c0_15] : memref<16x128xf32, #tpu.memory_space<vmem>>, vector<16x128xf32>
    tpu.vector_store %arg10[%c0_14, %c0_15], %20 {strides = array<i32>} : memref<16x128xf32, #tpu.memory_space<vmem>>, vector<16x128xf32>,
    %c0_i32_16 = arith.constant 0 : i32
    %22 = arith.cmpi eq, %arg1, %c0_i32_16 : i32
    %23 = arith.extui %22 : i1 to i32
    %c0_i32_17 = arith.constant 0 : i32
    %24 = arith.cmpi ne, %23, %c0_i32_17 : i32
    scf.if %24 {
      %c0_18 = arith.constant 0 : index
      %c0_19 = arith.constant 0 : index
      %25 = vector.load %arg10[%c0_18, %c0_19] : memref<16x128xf32, #tpu.memory_space<vmem>>, vector<16x128xf32>
      %c0_20 = arith.constant 0 : index
      %c0_21 = arith.constant 0 : index
      %26 = vector.load %arg6[%c0_20, %c0_21] : memref<1x128xf32, #tpu.memory_space<vmem>>, vector<1x128xf32>
      %27 = vector.broadcast %26 : vector<1x128xf32> to vector<16x128xf32>
      %28 = arith.addf %25, %27 : vector<16x128xf32>
      %cst_22 = arith.constant dense<0.000000e+00> : vector<16xf32>
      %29 = vector.multi_reduction <add>, %28, %cst_22 [1] : vector<16x128xf32> to vector<16xf32>
      %30 = vector.shape_cast %29 : vector<16xf32> to vector<16x1xf32>
      %cst_23 = arith.constant 6.250000e-02 : f32
      %31 = vector.broadcast %cst_23 : f32 to vector<16x1xf32>
      %32 = arith.mulf %30, %31 : vector<16x1xf32>
      %33 = arith.mulf %28, %28 : vector<16x128xf32>
      %cst_24 = arith.constant dense<0.000000e+00> : vector<16xf32>
      %34 = vector.multi_reduction <add>, %33, %cst_24 [1] : vector<16x128xf32> to vector<16xf32>
      %35 = vector.shape_cast %34 : vector<16xf32> to vector<16x1xf32>
      %cst_25 = arith.constant 6.250000e-02 : f32
      %36 = vector.broadcast %cst_25 : f32 to vector<16x1xf32>
      %37 = arith.mulf %35, %36 : vector<16x1xf32>
      %38 = arith.mulf %32, %32 : vector<16x1xf32>
      %39 = arith.subf %37, %38 : vector<16x1xf32>
      %cst_26 = arith.constant 0.000000e+00 : f32
      %40 = vector.broadcast %cst_26 : f32 to vector<16x1xf32>
      %41 = arith.maximumf %39, %40 : vector<16x1xf32>
      %42 = vector.broadcast %32 : vector<16x1xf32> to vector<16x128xf32>
      %43 = arith.subf %28, %42 : vector<16x128xf32>
      %cst_27 = arith.constant 9.99999974E-6 : f32
      %44 = vector.broadcast %cst_27 : f32 to vector<16x1xf32>
      %45 = arith.addf %41, %44 : vector<16x1xf32>
      %46 = math.rsqrt %45 : vector<16x1xf32>
      %47 = vector.broadcast %46 : vector<16x1xf32> to vector<16x128xf32>
      %48 = arith.mulf %43, %47 : vector<16x128xf32>
      %c0_28 = arith.constant 0 : index
      %c0_29 = arith.constant 0 : index
      %49 = vector.load %arg7[%c0_28, %c0_29] : memref<1x128xf32, #tpu.memory_space<vmem>>, vector<1x128xf32>
      %50 = vector.broadcast %49 : vector<1x128xf32> to vector<16x128xf32>
      %51 = arith.mulf %48, %50 : vector<16x128xf32>
      %c0_30 = arith.constant 0 : index
      %c0_31 = arith.constant 0 : index
      %52 = vector.load %arg8[%c0_30, %c0_31] : memref<1x128xf32, #tpu.memory_space<vmem>>, vector<1x128xf32>
      %53 = vector.broadcast %52 : vector<1x128xf32> to vector<16x128xf32>
      %54 = arith.addf %51, %53 : vector<16x128xf32>
      %55 = vector.extract_strided_slice %54 {offsets = [0, 0], sizes = [16, 16], strides = [1, 1]} : vector<16x128xf32> to vector<16x16xf32>
      %c0_32 = arith.constant 0 : index
      %c0_33 = arith.constant 0 : index
      %56 = vector.load %arg9[%c0_32, %c0_33] : memref<16x16xf32, #tpu.memory_space<vmem>>, vector<16x16xf32>
      tpu.vector_store %arg9[%c0_32, %c0_33], %55 {strides = array<i32>} : memref<16x16xf32, #tpu.memory_space<vmem>>, vector<16x16xf32>,
    } else {
    }
    return
  }
  func.func @transform_0(%arg0: i32, %arg1: i32) -> (i32, i32) {
    %c0_i32 = arith.constant 0 : i32
    %c0_i32_0 = arith.constant 0 : i32
    return %arg0, %c0_i32 : i32, i32
  }
  func.func @transform_1(%arg0: i32, %arg1: i32) -> (i32, i32) {
    %c0_i32 = arith.constant 0 : i32
    %c0_i32_0 = arith.constant 0 : i32
    return %c0_i32, %arg1 : i32, i32
  }
  func.func @transform_2(%arg0: i32, %arg1: i32) -> (i32, i32) {
    %c0_i32 = arith.constant 0 : i32
    %c0_i32_0 = arith.constant 0 : i32
    return %c0_i32, %arg1 : i32, i32
  }
  func.func @transform_3(%arg0: i32, %arg1: i32) -> (i32, i32) {
    %c0_i32 = arith.constant 0 : i32
    %c0_i32_0 = arith.constant 0 : i32
    return %arg1, %c0_i32 : i32, i32
  }
  func.func @transform_4(%arg0: i32, %arg1: i32) -> (i32, i32) {
    %c0_i32 = arith.constant 0 : i32
    %c0_i32_0 = arith.constant 0 : i32
    %c0_i32_1 = arith.constant 0 : i32
    return %c0_i32, %c0_i32_0 : i32, i32
  }
  func.func @transform_5(%arg0: i32, %arg1: i32) -> (i32, i32) {
    %c0_i32 = arith.constant 0 : i32
    %c0_i32_0 = arith.constant 0 : i32
    %c0_i32_1 = arith.constant 0 : i32
    return %c0_i32, %c0_i32_0 : i32, i32
  }
  func.func @transform_6(%arg0: i32, %arg1: i32) -> (i32, i32) {
    %c0_i32 = arith.constant 0 : i32
    %c0_i32_0 = arith.constant 0 : i32
    %c0_i32_1 = arith.constant 0 : i32
    return %c0_i32, %c0_i32_0 : i32, i32
  }
  func.func @transform_7(%arg0: i32, %arg1: i32) -> (i32, i32) {
    %c0_i32 = arith.constant 0 : i32
    %c0_i32_0 = arith.constant 0 : i32
    return %arg0, %c0_i32 : i32, i32
  }
}

</mosaic_0001>

<llo_original>
// kernel: enhanced_projection.1
$region0: #{enhanced_projection.1}
  #allocation0 [shape = 'u32[]', space=smem, size = 0x4, offset = 0x4, fixed_abs, tag = 'smem constant byte address 0x4 - core index']
  #allocation1 [shape = 'u32[144,128]{1,0:T(1,128)}', space=vmem, size = 0x12000, scoped, tag = 'internal scratch']
  #allocation2 [shape = 'f32[16,128]{1,0:T(8,128)}', space=vmem, size = 0x2000, scoped, tag = 'scratch operand']
  %s0 = inlined_call_operand.vmem [shape: f32[16,32], index: 0, kind: input, shape index: {}]
  %s1 = inlined_call_operand.vmem [shape: f32[32,128], index: 1, kind: input, shape index: {}]
  %s2 = inlined_call_operand.vmem [shape: f32[1,128], index: 2, kind: input, shape index: {}]
  %s3 = inlined_call_operand.vmem [shape: f32[128,128], index: 3, kind: input, shape index: {}]
  %s4 = inlined_call_operand.vmem [shape: f32[1,128], index: 4, kind: input, shape index: {}]
  %s5 = inlined_call_operand.vmem [shape: f32[1,128], index: 5, kind: input, shape index: {}]
  %s6 = inlined_call_operand.vmem [shape: f32[1,128], index: 6, kind: input, shape index: {}]
  %s7 = inlined_call_operand.hbm [shape: f32[16,16], index: 7, kind: output, shape index: {}]
  %s8 = sld [smem:[#allocation0]]
  $region46: #{enhanced_projection.1} parent=0
    _
  %s10 = ssub.s32 1, %s8
  %s11 = scalar_select 0, %s10, %s8
  $region1: #{enhanced_projection.1} parent=0
    #allocation3 [shape = 'u8[8192]{0}', space=vmem, size = 0x2000, scoped, tag = 'output window, operand 0, single buffered']
    #allocation4 [shape = 's32[1]{0}', space=sflag, size = 0x4, scoped, tag = 'scoped memory for enhanced_projection.1']
    %12 = vsyncpa [#allocation4], 0
    // Predicated region
    $region2: #{enhanced_projection.1} parent=1 // pred_check
      _
    $region3: #{enhanced_projection.1} parent=1 // pred_check_branch
      %14 = sbr.rel (0) target = $region5
    $region4: #{enhanced_projection.1} parent=1 // pred_region
      _
    $region5: #{enhanced_projection.1} parent=1 // pred_fallthru
      _
    // Predicated region
    $region6: #{enhanced_projection.1} parent=1 // pred_check
      _
    $region7: #{enhanced_projection.1} parent=1 // pred_check_branch
      %16 = sbr.rel (0) target = $region9
    $region8: #{enhanced_projection.1} parent=1 // pred_region
      _
    $region9: #{enhanced_projection.1} parent=1 // pred_fallthru
      _
    // Predicated region
    $region10: #{enhanced_projection.1} parent=1 // pred_check
      _
    $region11: #{enhanced_projection.1} parent=1 // pred_check_branch
      %18 = sbr.rel (0) target = $region13
    $region12: #{enhanced_projection.1} parent=1 // pred_region
      _
    $region13: #{enhanced_projection.1} parent=1 // pred_fallthru
      _
    // Predicated region
    $region14: #{enhanced_projection.1} parent=1 // pred_check
      _
    $region15: #{enhanced_projection.1} parent=1 // pred_check_branch
      %20 = sbr.rel (0) target = $region17
    $region16: #{enhanced_projection.1} parent=1 // pred_region
      _
    $region17: #{enhanced_projection.1} parent=1 // pred_fallthru
      _
    // Predicated region
    $region18: #{enhanced_projection.1} parent=1 // pred_check
      _
    $region19: #{enhanced_projection.1} parent=1 // pred_check_branch
      %22 = sbr.rel (0) target = $region21
    $region20: #{enhanced_projection.1} parent=1 // pred_region
      _
    $region21: #{enhanced_projection.1} parent=1 // pred_fallthru
      _
    // Predicated region
    $region22: #{enhanced_projection.1} parent=1 // pred_check
      _
    $region23: #{enhanced_projection.1} parent=1 // pred_check_branch
      %24 = sbr.rel (0) target = $region25
    $region24: #{enhanced_projection.1} parent=1 // pred_region
      _
    $region25: #{enhanced_projection.1} parent=1 // pred_fallthru
      _
    // Predicated region
    $region26: #{enhanced_projection.1} parent=1 // pred_check
      _
    $region27: #{enhanced_projection.1} parent=1 // pred_check_branch
      %26 = sbr.rel (0) target = $region29
    $region28: #{enhanced_projection.1} parent=1 // pred_region
      _
    $region29: #{enhanced_projection.1} parent=1 // pred_fallthru
      _
    %p27 = scmp.eq.s32.totalorder 0, 0
    // Predicated region
    $region30: #{enhanced_projection.1} parent=1 // pred_check
      %p28 = pneg %p27
    $region31: #{enhanced_projection.1} parent=1 // pred_check_branch
      %30 = sbr.rel (%p28) target = $region33
    $region32: #{enhanced_projection.1} parent=1 // pred_region
      %31 = vst [vmem:[#allocation2] sm:$0xff] 0.0
      %32 = vst [vmem:[#allocation2 + $0x8] sm:$0xff] 0.0
    $region33: #{enhanced_projection.1} parent=1 // pred_fallthru
      _
    %v33 = vld [vmem:[%s0] sm:$0xff]
    %v34 = vld [vmem:[%s0 + $0x8] sm:$0xff]
    %v35 = vld [vmem:[%s1] sm:$0xff]
    %v36 = vld [vmem:[%s1 + $0x8] sm:$0xff]
    %v37 = vld [vmem:[%s1 + $0x10] sm:$0xff]
    %v38 = vld [vmem:[%s1 + $0x18] sm:$0xff]
    %v39 = vld [vmem:[%s2] sm:$0x1]
    %v41 = vlaneseq
    %v42 = vshrl.u32 %v41, 7
    %v43 = vsub.s32 0, %v42
    %v44 = vrot.slane %v39, %v43
    %vm46 = vcmask 261120
    %v48 = vsel %vm46, %v33, 0
    %v51 = vsel %vm46, %v34, 0
    %53 = vmatprep.subr.mxu0 0.0
    %54 = vmatpush1.msra.mxu0 0.0
    %55 = vmatprep.subr.mxu0 0.0
    %56 = vmatpush1.msra.mxu0 0.0
    %57 = vmatprep.subr.mxu0 0.0
    %58 = vmatpush1.msra.mxu0 0.0
    %59 = vmatprep.subr.mxu0 0.0
    %60 = vmatpush1.msra.mxu0 0.0
    %61 = vmatprep.subr.mxu0 0.0
    %62 = vmatpush1.msra.mxu0 0.0
    %63 = vmatprep.subr.mxu0 0.0
    %64 = vmatpush1.msra.mxu0 0.0
    %65 = vmatprep.subr.mxu0 0.0
    %66 = vmatpush1.msra.mxu0 0.0
    %67 = vmatprep.subr.mxu0 0.0
    %68 = vmatpush1.msra.mxu0 0.0
    %69 = vmatprep.subr.mxu0 0.0
    %70 = vmatpush1.msra.mxu0 0.0
    %71 = vmatprep.subr.mxu0 0.0
    %72 = vmatpush1.msra.mxu0 0.0
    %73 = vmatprep.subr.mxu0 0.0
    %74 = vmatpush1.msra.mxu0 0.0
    %75 = vmatprep.subr.mxu0 0.0
    %76 = vmatpush1.msra.mxu0 0.0
    %77 = vmatprep.subr.mxu0 0.0
    %78 = vmatpush1.msra.mxu0 %v38
    %79 = vmatprep.subr.mxu0 0.0
    %80 = vmatpush1.msra.mxu0 %v37
    %81 = vmatprep.subr.mxu0 0.0
    %82 = vmatpush1.msra.mxu0 %v36
    %83 = vmatprep.subr.mxu0 0.0
    %84 = vmatpush1.msra.mxu0 %v35
    %85 = vmatprep.subr.mxu0 0.0
    %86 = vmatpush2.msra.mxu0 0.0
    %87 = vmatprep.subr.mxu0 0.0
    %88 = vmatpush2.msra.mxu0 0.0
    %89 = vmatprep.subr.mxu0 0.0
    %90 = vmatpush2.msra.mxu0 0.0
    %91 = vmatprep.subr.mxu0 0.0
    %92 = vmatpush2.msra.mxu0 0.0
    %93 = vmatprep.subr.mxu0 0.0
    %94 = vmatpush2.msra.mxu0 0.0
    %95 = vmatprep.subr.mxu0 0.0
    %96 = vmatpush2.msra.mxu0 0.0
    %97 = vmatprep.subr.mxu0 0.0
    %98 = vmatpush2.msra.mxu0 0.0
    %99 = vmatprep.subr.mxu0 0.0
    %100 = vmatpush2.msra.mxu0 0.0
    %101 = vmatprep.subr.mxu0 0.0
    %102 = vmatpush2.msra.mxu0 0.0
    %103 = vmatprep.subr.mxu0 0.0
    %104 = vmatpush2.msra.mxu0 0.0
    %105 = vmatprep.subr.mxu0 0.0
    %106 = vmatpush2.msra.mxu0 0.0
    %107 = vmatprep.subr.mxu0 0.0
    %108 = vmatpush2.msra.mxu0 0.0
    %109 = vmatprep.subr.mxu0 0.0
    %110 = vmatpush2.msra.mxu0 0.0
    %111 = vmatprep.subr.mxu0 0.0
    %112 = vmatpush2.msra.mxu0 0.0
    %113 = vmatprep.subr.mxu0 0.0
    %114 = vmatpush2.msra.mxu0 0.0
    %115 = vmatprep.subr.mxu0 0.0
    %116 = vmatpush2.msra.mxu0 0.0
    %117 = vmatprep.mubr.f32.mxu0 0.0
    %118 = vmatmul.mubr.f32.gmra.mxu0 %v48
    %v119 = vpop.f32.mrf.mxu0
    %v120 = vadd.f32 %v44, %v119
    %v121 = vpop.f32.mrf.mxu0
    %122 = vmatprep.mubr.f32.mxu0 0.0
    %123 = vmatmul.mubr.f32.gmra.mxu0 %v51
    %v124 = vpop.f32.mrf.mxu0
    %v125 = vadd.f32 %v44, %v124
    %v126 = vpop.f32.mrf.mxu0
    %127 = vdwg.mxu0
    %v128 = vmul.f32 %v120, 0.5
    %v129 = vmul.f32 %v125, 0.5
    %v130 = vmul.f32 %v120, 0.70710677
    %v131 = vmul.f32 %v125, 0.70710677
    %v132 = verf.f32.pop %v130
    %v133 = verf.f32.pop %v131
    %v134 = vadd.f32 %v132, 1.0
    %v135 = vadd.f32 %v133, 1.0
    %v136 = vmul.f32 %v128, %v134
    %v137 = vmul.f32 %v129, %v135
    %v138 = vld [vmem:[#allocation2] sm:$0xff]
    %v139 = vld [vmem:[#allocation2 + $0x8] sm:$0xff]
    %v140 = vld [vmem:[%s3] sm:$0xff]
    %v141 = vld [vmem:[%s3 + $0x8] sm:$0xff]
    %v142 = vld [vmem:[%s3 + $0x10] sm:$0xff]
    %v143 = vld [vmem:[%s3 + $0x18] sm:$0xff]
    %v144 = vld [vmem:[%s3 + $0x20] sm:$0xff]
    %v145 = vld [vmem:[%s3 + $0x28] sm:$0xff]
    %v146 = vld [vmem:[%s3 + $0x30] sm:$0xff]
    %v147 = vld [vmem:[%s3 + $0x38] sm:$0xff]
    %v148 = vld [vmem:[%s3 + $0x40] sm:$0xff]
    %v149 = vld [vmem:[%s3 + $0x48] sm:$0xff]
    %v150 = vld [vmem:[%s3 + $0x50] sm:$0xff]
    %v151 = vld [vmem:[%s3 + $0x58] sm:$0xff]
    %v152 = vld [vmem:[%s3 + $0x60] sm:$0xff]
    %v153 = vld [vmem:[%s3 + $0x68] sm:$0xff]
    %v154 = vld [vmem:[%s3 + $0x70] sm:$0xff]
    %v155 = vld [vmem:[%s3 + $0x78] sm:$0xff]
    %156 = vmatprep.subr.mxu0 0.0
    %157 = vmatpush1.msra.mxu0 %v155
    %158 = vmatprep.subr.mxu0 0.0
    %159 = vmatpush1.msra.mxu0 %v154
    %160 = vmatprep.subr.mxu0 0.0
    %161 = vmatpush1.msra.mxu0 %v153
    %162 = vmatprep.subr.mxu0 0.0
    %163 = vmatpush1.msra.mxu0 %v152
    %164 = vmatprep.subr.mxu0 0.0
    %165 = vmatpush1.msra.mxu0 %v151
    %166 = vmatprep.subr.mxu0 0.0
    %167 = vmatpush1.msra.mxu0 %v150
    %168 = vmatprep.subr.mxu0 0.0
    %169 = vmatpush1.msra.mxu0 %v149
    %170 = vmatprep.subr.mxu0 0.0
    %171 = vmatpush1.msra.mxu0 %v148
    %172 = vmatprep.subr.mxu0 0.0
    %173 = vmatpush1.msra.mxu0 %v147
    %174 = vmatprep.subr.mxu0 0.0
    %175 = vmatpush1.msra.mxu0 %v146
    %176 = vmatprep.subr.mxu0 0.0
    %177 = vmatpush1.msra.mxu0 %v145
    %178 = vmatprep.subr.mxu0 0.0
    %179 = vmatpush1.msra.mxu0 %v144
    %180 = vmatprep.subr.mxu0 0.0
    %181 = vmatpush1.msra.mxu0 %v143
    %182 = vmatprep.subr.mxu0 0.0
    %183 = vmatpush1.msra.mxu0 %v142
    %184 = vmatprep.subr.mxu0 0.0
    %185 = vmatpush1.msra.mxu0 %v141
    %186 = vmatprep.subr.mxu0 0.0
    %187 = vmatpush1.msra.mxu0 %v140
    %188 = vmatprep.subr.mxu0 0.0
    %189 = vmatpush2.msra.mxu0 0.0
    %190 = vmatprep.subr.mxu0 0.0
    %191 = vmatpush2.msra.mxu0 0.0
    %192 = vmatprep.subr.mxu0 0.0
    %193 = vmatpush2.msra.mxu0 0.0
    %194 = vmatprep.subr.mxu0 0.0
    %195 = vmatpush2.msra.mxu0 0.0
    %196 = vmatprep.subr.mxu0 0.0
    %197 = vmatpush2.msra.mxu0 0.0
    %198 = vmatprep.subr.mxu0 0.0
    %199 = vmatpush2.msra.mxu0 0.0
    %200 = vmatprep.subr.mxu0 0.0
    %201 = vmatpush2.msra.mxu0 0.0
    %202 = vmatprep.subr.mxu0 0.0
    %203 = vmatpush2.msra.mxu0 0.0
    %204 = vmatprep.subr.mxu0 0.0
    %205 = vmatpush2.msra.mxu0 0.0
    %206 = vmatprep.subr.mxu0 0.0
    %207 = vmatpush2.msra.mxu0 0.0
    %208 = vmatprep.subr.mxu0 0.0
    %209 = vmatpush2.msra.mxu0 0.0
    %210 = vmatprep.subr.mxu0 0.0
    %211 = vmatpush2.msra.mxu0 0.0
    %212 = vmatprep.subr.mxu0 0.0
    %213 = vmatpush2.msra.mxu0 0.0
    %214 = vmatprep.subr.mxu0 0.0
    %215 = vmatpush2.msra.mxu0 0.0
    %216 = vmatprep.subr.mxu0 0.0
    %217 = vmatpush2.msra.mxu0 0.0
    %218 = vmatprep.subr.mxu0 0.0
    %219 = vmatpush2.msra.mxu0 0.0
    %220 = vmatprep.mubr.f32.mxu0 0.0
    %221 = vmatmul.mubr.f32.gmra.mxu0 %v136
    %v222 = vpop.f32.mrf.mxu0
    %v223 = vadd.f32 0.0, %v222
    %v224 = vpop.f32.mrf.mxu0
    %225 = vmatprep.mubr.f32.mxu0 0.0
    %226 = vmatmul.mubr.f32.gmra.mxu0 %v137
    %v227 = vpop.f32.mrf.mxu0
    %v228 = vadd.f32 0.0, %v227
    %v229 = vpop.f32.mrf.mxu0
    %230 = vdwg.mxu0
    %v231 = vadd.f32 %v138, %v223
    %v232 = vadd.f32 %v139, %v228
    %233 = vst [vmem:[#allocation2] sm:$0xff] %v231
    %234 = vst [vmem:[#allocation2 + $0x8] sm:$0xff] %v232
    // Predicated region
    $region34: #{enhanced_projection.1} parent=1 // pred_check
      %p235 = pneg %p27
    $region35: #{enhanced_projection.1} parent=1 // pred_check_branch
      %237 = sbr.rel (%p235) target = $region37
    $region36: #{enhanced_projection.1} parent=1 // pred_region
      %v238 = vld [vmem:[#allocation2] sm:$0xff]
      %v239 = vld [vmem:[#allocation2 + $0x8] sm:$0xff]
      %v240 = vld [vmem:[%s4] sm:$0x1]
      %v242 = vlaneseq
      %v243 = vshrl.u32 %v242, 7
      %v244 = vsub.s32 0, %v243
      %v245 = vrot.slane %v240, %v244
      %v247 = vadd.f32 %v238, %v245
      %v248 = vadd.f32 %v239, %v245
      %249 = vadd.xlane.f32.xlu0 %v247
      %v250 = vpop.xlane.xlu0 %249
      %251 = vadd.xlane.f32.xlu0 %v248
      %v252 = vpop.xlane.xlu0 %251
      %v253 = vmul.f32 %v250, 0.0625
      %v254 = vmul.f32 %v252, 0.0625
      %v255 = vmul.f32 %v247, %v247
      %v256 = vmul.f32 %v248, %v248
      %257 = vadd.xlane.f32.xlu0 %v255
      %v258 = vpop.xlane.xlu0 %257
      %259 = vadd.xlane.f32.xlu0 %v256
      %v260 = vpop.xlane.xlu0 %259
      %v261 = vmul.f32 %v258, 0.0625
      %v262 = vmul.f32 %v260, 0.0625
      %v263 = vmul.f32 %v253, %v253
      %v264 = vmul.f32 %v254, %v254
      %v265 = vsub.f32 %v261, %v263
      %v266 = vsub.f32 %v262, %v264
      %v267 = vmax.f32 %v265, 0.0
      %v268 = vmax.f32 %v266, 0.0
      %v269 = vsub.f32 %v247, %v253
      %v270 = vsub.f32 %v248, %v254
      %v271 = vadd.f32 %v267, 1e-05
      %v272 = vadd.f32 %v268, 1e-05
      %v273 = vrsqrt.pop %v271
      %v274 = vrsqrt.pop %v272
      %v275 = vmul.f32 %v269, %v273
      %v276 = vmul.f32 %v270, %v274
      %v277 = vld [vmem:[%s5] sm:$0x1]
      %v279 = vlaneseq
      %v280 = vshrl.u32 %v279, 7
      %v281 = vsub.s32 0, %v280
      %v282 = vrot.slane %v277, %v281
      %v284 = vmul.f32 %v275, %v282
      %v285 = vmul.f32 %v276, %v282
      %v286 = vld [vmem:[%s6] sm:$0x1]
      %v288 = vlaneseq
      %v289 = vshrl.u32 %v288, 7
      %v290 = vsub.s32 0, %v289
      %v291 = vrot.slane %v286, %v290
      %v293 = vadd.f32 %v284, %v291
      %v294 = vadd.f32 %v285, %v291
      %vm295 = vcmask 130048
      %296 = vst.msk [vmem:[#allocation3] sm:$0xff] %vm295, %v293
      %297 = vst.msk [vmem:[#allocation3 + $0x8] sm:$0xff] %vm295, %v294
    $region37: #{enhanced_projection.1} parent=1 // pred_fallthru
      _
    // Predicated region
    $region38: #{enhanced_projection.1} parent=1 // pred_check
      _
    $region39: #{enhanced_projection.1} parent=1 // pred_check_branch
      %299 = sbr.rel (0) target = $region41
    $region40: #{enhanced_projection.1} parent=1 // pred_region
      %s301 = ssub.s32 256, 256
      %302 = vsyncadd [#allocation4], %s301
      %s303 = sshll.u32 [#allocation3], 4
      %s304 = int_to_ptr.vmem [resolvable:$true] %s303
      %309 = dma.vmem_to_hbm [thread:$0]  %s304, 256, %s7, [#allocation4], 128, 128, 8
    $region41: #{enhanced_projection.1} parent=1 // pred_fallthru
      _
    // Predicated region
    $region42: #{enhanced_projection.1} parent=1 // pred_check
      _
    $region43: #{enhanced_projection.1} parent=1 // pred_check_branch
      %311 = sbr.rel (0) target = $region45
    $region44: #{enhanced_projection.1} parent=1 // pred_region
      %312 = dma.done [#allocation4], 256
    $region45: #{enhanced_projection.1} parent=1 // pred_fallthru
      _
    %313 = vsyncpa [#allocation4], 1

</llo_original>
